<compile_context>
chip_gen: v7x
topology: tpu7x:2x2x1
jax: 0.10.0
libtpu: 0.0.40
codegen_flags: <defaults>
</compile_context>

<pallas_src>
import functools

import jax
import jax.numpy as jnp
from jax.experimental import pallas as pl
from jax.experimental.pallas import tpu as pltpu


def _round_up(x: int, m: int) -> int:
    return (x + m - 1) // m * m


def _sublane_multiple(dtype) -> int:
    # Native sublane tiling: 8 rows for 4-byte, 16 for 2-byte, 32 for 1-byte.
    return max(8, 32 // jnp.dtype(dtype).itemsize)


def _vmem_capacity_bytes() -> int:
    try:
        info = pltpu.get_tpu_info()
        for name in ("vmem_capacity_bytes", "vmem_size_bytes", "vmem_bytes"):
            v = getattr(info, name, None)
            if v:
                return int(v)
    except Exception:
        pass
    return 64 * 1024 * 1024  # conservative fallback (v7x per-TensorCore)


def _iou_partial_kernel(pred_ref, target_ref, inter_ref, sum_ref,
                        inter_acc, sum_acc, *,
                        S, tS, n_s_chunk, n_s_total, ragged):
    c = pl.program_id(0)          # spatial super-chunk (parallel)
    s = pl.program_id(2)          # spatial tile within the chunk (reduction)

    @pl.when(s == 0)
    def _init():
        inter_acc[...] = jnp.zeros_like(inter_acc)
        sum_acc[...] = jnp.zeros_like(sum_acc)

    x = pred_ref[...].astype(jnp.float32)
    # sigmoid as a single EUP transcendental (tanh) + cheap VPU mul/add.
    p = jnp.tanh(x * 0.5) * 0.5 + 0.5
    t = target_ref[...].astype(jnp.float32)

    def _accumulate(p, t):
        inter_acc[...] += jnp.sum(p * t, axis=1, keepdims=True)
        sum_acc[...] += (jnp.sum(p, axis=1, keepdims=True)
                         + jnp.sum(t, axis=1, keepdims=True))

    if ragged:
        abs_s = c * n_s_chunk + s
        valid = S - abs_s * tS          # valid lanes in this tile
        is_full = valid >= tS

        @pl.when(is_full)
        def _full_tile():
            _accumulate(p, t)

        @pl.when(jnp.logical_not(is_full))
        def _ragged_tile():
            # Only runs on the true last spatial tile (or a clamped overrun
            # step, where the mask is all-False so nothing is accumulated).
            col = jax.lax.broadcasted_iota(jnp.int32, p.shape, 1)
            m = col < valid
            _accumulate(jnp.where(m, p, 0.0), jnp.where(m, t, 0.0))
    else:
        _accumulate(p, t)

    @pl.when(s == n_s_chunk - 1)
    def _finalize():
        inter_ref[...] = jnp.broadcast_to(inter_acc[...], inter_ref.shape)
        sum_ref[...] = jnp.broadcast_to(sum_acc[...], sum_ref.shape)


@jax.jit
def iou_loss(pred, target):
    """pred, target: (N, C, H, W). Returns scalar f32 IoU loss."""
    N, C, H, W = pred.shape
    R, S = N * C, H * W

    p2 = pred.reshape(R, S)       # contiguous reshape: no HBM copy
    t2 = target.reshape(R, S)

    ip = jnp.dtype(p2.dtype).itemsize
    it = jnp.dtype(t2.dtype).itemsize

    # ---- row tile ----------------------------------------------------------
    # Full-dim blocks are always legal (no 8-row requirement); otherwise use a
    # 256-row tile (multiple of 8/16/32 for every dtype packing).
    tR = R if R <= 256 else 256
    n_r = pl.cdiv(R, tR)

    # ---- spatial (lane) tile: sized purely from the VMEM byte budget -------
    vmem_cap = _vmem_capacity_bytes()
    in_budget = min(24 << 20, vmem_cap // 4)       # both inputs, double-buffered
    # Bytes per lane-column of one (pred, target) buffer pair, incl. sublane padding.
    col_bytes = (_round_up(tR, _sublane_multiple(p2.dtype)) * ip
                 + _round_up(tR, _sublane_multiple(t2.dtype)) * it)
    if S < 128:
        tS = S                                      # full-dim block
    else:
        budget_ts = max(128, (in_budget // (2 * col_bytes)) // 128 * 128)
        tS = min(budget_ts, (S // 128) * 128)
    n_s_total = pl.cdiv(S, tS)

    # ---- spatial super-chunks: keep both v7x TensorCores busy when the row
    # ---- axis has only one block -------------------------------------------
    n_chunks = 2 if (n_r == 1 and n_s_total >= 2) else 1
    n_s_chunk = pl.cdiv(n_s_total, n_chunks)

    ragged = (S % tS != 0) or (n_chunks * n_s_chunk != n_s_total)

    grid = (n_chunks, n_r, n_s_chunk)
    R_out = n_r * tR

    kernel = functools.partial(
        _iou_partial_kernel,
        S=S, tS=tS, n_s_chunk=n_s_chunk, n_s_total=n_s_total, ragged=ragged)

    def in_map(c, r, s):
        # Clamp so an overrun step in the last chunk re-reads the final valid
        # tile (its contribution is masked off in-kernel).
        return (r, jnp.minimum(c * n_s_chunk + s, n_s_total - 1))

    in_bytes = 2 * col_bytes * tS                               # double-buffered inputs
    out_bytes = 2 * 2 * _round_up(tR, 8) * 128 * 4              # 2 outputs, double-buffered
    vmem_limit = int(min(0.9 * vmem_cap, in_bytes + out_bytes + (16 << 20)))

    cost = pl.CostEstimate(
        flops=6 * R * S,
        transcendentals=R * S,
        bytes_accessed=R * S * (ip + it) + 2 * n_chunks * R_out * 128 * 4)

    inter_parts, sum_parts = pl.pallas_call(
        kernel,
        out_shape=(jax.ShapeDtypeStruct((n_chunks, R_out, 128), jnp.float32),
                   jax.ShapeDtypeStruct((n_chunks, R_out, 128), jnp.float32)),
        grid=grid,
        in_specs=[
            pl.BlockSpec((tR, tS), in_map),
            pl.BlockSpec((tR, tS), in_map),
        ],
        out_specs=(
            pl.BlockSpec((None, tR, 128), lambda c, r, s: (c, r, 0)),
            pl.BlockSpec((None, tR, 128), lambda c, r, s: (c, r, 0)),
        ),
        scratch_shapes=[
            pltpu.VMEM((tR, 1), jnp.float32),   # running inter
            pltpu.VMEM((tR, 1), jnp.float32),   # running sum_p + sum_t
        ],
        compiler_params=pltpu.CompilerParams(
            dimension_semantics=("parallel", "parallel", "arbitrary"),
            vmem_limit_bytes=vmem_limit,
        ),
        cost_estimate=cost,
    )(p2, t2)

    # Tiny combine in the wrapper: chunk partials -> per-(n,c) IoU -> nanmean.
    inter = jnp.sum(inter_parts[:, :R, 0], axis=0)     # (N*C,)
    sums = jnp.sum(sum_parts[:, :R, 0], axis=0)        # (N*C,) sum_p + sum_t
    union = sums - inter
    iou = 1.0 - inter / (union + 1e-8)
    return jnp.nanmean(iou)


if __name__ == "__main__":
    key = jax.random.PRNGKey(0)
    k1, k2, k3, k4 = jax.random.split(key, 4)

    def reference(pred, target):
        p = jax.nn.sigmoid(pred.astype(jnp.float32))
        t = target.astype(jnp.float32)
        inter = jnp.sum(p * t, axis=(2, 3))
        union = jnp.sum(p + t, axis=(2, 3)) - inter
        return jnp.nanmean(1.0 - inter / (union + 1e-8))

    # Case 1: canonical small SAM-style shape (spatial size a multiple of 128).
    pred1 = jax.random.normal(k1, (2, 4, 16, 16), dtype=jnp.float32)
    target1 = (jax.random.uniform(k2, (2, 4, 16, 16)) > 0.5).astype(jnp.int8)

    # Case 2: ragged spatial size (15*17 = 255) and N*C = 6 (not a multiple of
    # 8) -- exercises the in-kernel mask + super-chunk paths with no jnp.pad.
    pred2 = jax.random.normal(k3, (2, 3, 15, 17), dtype=jnp.float32)
    target2 = (jax.random.uniform(k4, (2, 3, 15, 17)) > 0.5).astype(jnp.int8)

    for pred, target in ((pred1, target1), (pred2, target2)):
        loss = jax.block_until_ready(iou_loss(pred, target))
        ref = jax.block_until_ready(reference(pred, target))
        assert jnp.allclose(loss, ref, atol=1e-5, rtol=1e-5), (pred.shape, loss, ref)

    print("KERNEL_OK")
</pallas_src>

<mosaic_0001>
module attributes {stable_mosaic.version = 11 : i64} {
  func.func @_iou_partial_kernel(%arg0: i32, %arg1: i32, %arg2: i32, %arg3: memref<8x256xf32, #tpu.memory_space<vmem>>, %arg4: memref<8x256xi8, #tpu.memory_space<vmem>>, %arg5: memref<1x8x128xf32, #tpu.memory_space<vmem>>, %arg6: memref<1x8x128xf32, #tpu.memory_space<vmem>>, %arg7: memref<8x1xf32, #tpu.memory_space<vmem>>, %arg8: memref<8x1xf32, #tpu.memory_space<vmem>>) attributes {dimension_semantics = [#tpu.dimension_semantics<parallel>, #tpu.dimension_semantics<parallel>, #tpu.dimension_semantics<arbitrary>], iteration_bounds = array<i64: 1, 1, 1>, scalar_prefetch = 0 : i64, scratch_operands = 2 : i64, tpu.core_type = #tpu.core_type<tc>, window_params = [{transform_indices = @transform_0, window_bounds = array<i64: 8, 256>}, {transform_indices = @transform_1, window_bounds = array<i64: 8, 256>}, {transform_indices = @transform_2, window_bounds = array<i64: 1, 8, 128>}, {transform_indices = @transform_3, window_bounds = array<i64: 1, 8, 128>}]} {
    %c0_i32 = arith.constant 0 : i32
    %0 = arith.cmpi eq, %arg2, %c0_i32 : i32
    %1 = arith.extui %0 : i1 to i32
    %c0_i32_0 = arith.constant 0 : i32
    %2 = arith.cmpi ne, %1, %c0_i32_0 : i32
    scf.if %2 {
      %cst_19 = arith.constant 0.000000e+00 : f32
      %30 = vector.broadcast %cst_19 : f32 to vector<8x1xf32>
      %c0_20 = arith.constant 0 : index
      %c0_21 = arith.constant 0 : index
      %31 = vector.load %arg7[%c0_20, %c0_21] : memref<8x1xf32, #tpu.memory_space<vmem>>, vector<8x1xf32>
      tpu.vector_store %arg7[%c0_20, %c0_21], %30 {strides = array<i32>} : memref<8x1xf32, #tpu.memory_space<vmem>>, vector<8x1xf32>,
      %cst_22 = arith.constant 0.000000e+00 : f32
      %32 = vector.broadcast %cst_22 : f32 to vector<8x1xf32>
      %c0_23 = arith.constant 0 : index
      %c0_24 = arith.constant 0 : index
      %33 = vector.load %arg8[%c0_23, %c0_24] : memref<8x1xf32, #tpu.memory_space<vmem>>, vector<8x1xf32>
      tpu.vector_store %arg8[%c0_23, %c0_24], %32 {strides = array<i32>} : memref<8x1xf32, #tpu.memory_space<vmem>>, vector<8x1xf32>,
    } else {
    }
    %c0 = arith.constant 0 : index
    %c0_1 = arith.constant 0 : index
    %3 = vector.load %arg3[%c0, %c0_1] : memref<8x256xf32, #tpu.memory_space<vmem>>, vector<8x256xf32>
    %cst = arith.constant 5.000000e-01 : f32
    %4 = vector.broadcast %cst : f32 to vector<8x256xf32>
    %5 = arith.mulf %3, %4 : vector<8x256xf32>
    %6 = math.tanh %5 : vector<8x256xf32>
    %cst_2 = arith.constant 5.000000e-01 : f32
    %7 = vector.broadcast %cst_2 : f32 to vector<8x256xf32>
    %8 = arith.mulf %6, %7 : vector<8x256xf32>
    %cst_3 = arith.constant 5.000000e-01 : f32
    %9 = vector.broadcast %cst_3 : f32 to vector<8x256xf32>
    %10 = arith.addf %8, %9 : vector<8x256xf32>
    %c0_4 = arith.constant 0 : index
    %c0_5 = arith.constant 0 : index
    %11 = vector.load %arg4[%c0_4, %c0_5] : memref<8x256xi8, #tpu.memory_space<vmem>>, vector<8x256xi8>
    %12 = arith.sitofp %11 : vector<8x256xi8> to vector<8x256xf32>
    %c0_6 = arith.constant 0 : index
    %c0_7 = arith.constant 0 : index
    %13 = vector.load %arg7[%c0_6, %c0_7] : memref<8x1xf32, #tpu.memory_space<vmem>>, vector<8x1xf32>
    %14 = arith.mulf %10, %12 : vector<8x256xf32>
    %cst_8 = arith.constant dense<0.000000e+00> : vector<8xf32>
    %15 = vector.multi_reduction <add>, %14, %cst_8 [1] : vector<8x256xf32> to vector<8xf32>
    %16 = vector.shape_cast %15 : vector<8xf32> to vector<8x1xf32>
    %17 = arith.addf %13, %16 : vector<8x1xf32>
    %c0_9 = arith.constant 0 : index
    %c0_10 = arith.constant 0 : index
    %18 = vector.load %arg7[%c0_9, %c0_10] : memref<8x1xf32, #tpu.memory_space<vmem>>, vector<8x1xf32>
    tpu.vector_store %arg7[%c0_9, %c0_10], %17 {strides = array<i32>} : memref<8x1xf32, #tpu.memory_space<vmem>>, vector<8x1xf32>,
    %c0_11 = arith.constant 0 : index
    %c0_12 = arith.constant 0 : index
    %19 = vector.load %arg8[%c0_11, %c0_12] : memref<8x1xf32, #tpu.memory_space<vmem>>, vector<8x1xf32>
    %cst_13 = arith.constant dense<0.000000e+00> : vector<8xf32>
    %20 = vector.multi_reduction <add>, %10, %cst_13 [1] : vector<8x256xf32> to vector<8xf32>
    %21 = vector.shape_cast %20 : vector<8xf32> to vector<8x1xf32>
    %cst_14 = arith.constant dense<0.000000e+00> : vector<8xf32>
    %22 = vector.multi_reduction <add>, %12, %cst_14 [1] : vector<8x256xf32> to vector<8xf32>
    %23 = vector.shape_cast %22 : vector<8xf32> to vector<8x1xf32>
    %24 = arith.addf %21, %23 : vector<8x1xf32>
    %25 = arith.addf %19, %24 : vector<8x1xf32>
    %c0_15 = arith.constant 0 : index
    %c0_16 = arith.constant 0 : index
    %26 = vector.load %arg8[%c0_15, %c0_16] : memref<8x1xf32, #tpu.memory_space<vmem>>, vector<8x1xf32>
    tpu.vector_store %arg8[%c0_15, %c0_16], %25 {strides = array<i32>} : memref<8x1xf32, #tpu.memory_space<vmem>>, vector<8x1xf32>,
    %c0_i32_17 = arith.constant 0 : i32
    %27 = arith.cmpi eq, %arg2, %c0_i32_17 : i32
    %28 = arith.extui %27 : i1 to i32
    %c0_i32_18 = arith.constant 0 : i32
    %29 = arith.cmpi ne, %28, %c0_i32_18 : i32
    scf.if %29 {
      %c0_19 = arith.constant 0 : index
      %c0_20 = arith.constant 0 : index
      %30 = vector.load %arg7[%c0_19, %c0_20] : memref<8x1xf32, #tpu.memory_space<vmem>>, vector<8x1xf32>
      %31 = vector.shape_cast %30 : vector<8x1xf32> to vector<8x1xf32>
      %32 = vector.broadcast %31 : vector<8x1xf32> to vector<8x128xf32>
      %c0_21 = arith.constant 0 : index
      %c0_22 = arith.constant 0 : index
      %c0_23 = arith.constant 0 : index
      %33 = vector.load %arg5[%c0_21, %c0_22, %c0_23] : memref<1x8x128xf32, #tpu.memory_space<vmem>>, vector<1x8x128xf32>
      %34 = vector.shape_cast %33 : vector<1x8x128xf32> to vector<8x128xf32>
      %35 = vector.shape_cast %32 : vector<8x128xf32> to vector<1x8x128xf32>
      tpu.vector_store %arg5[%c0_21, %c0_22, %c0_23], %35 {strides = array<i32>} : memref<1x8x128xf32, #tpu.memory_space<vmem>>, vector<1x8x128xf32>,
      %c0_24 = arith.constant 0 : index
      %c0_25 = arith.constant 0 : index
      %36 = vector.load %arg8[%c0_24, %c0_25] : memref<8x1xf32, #tpu.memory_space<vmem>>, vector<8x1xf32>
      %37 = vector.shape_cast %36 : vector<8x1xf32> to vector<8x1xf32>
      %38 = vector.broadcast %37 : vector<8x1xf32> to vector<8x128xf32>
      %c0_26 = arith.constant 0 : index
      %c0_27 = arith.constant 0 : index
      %c0_28 = arith.constant 0 : index
      %39 = vector.load %arg6[%c0_26, %c0_27, %c0_28] : memref<1x8x128xf32, #tpu.memory_space<vmem>>, vector<1x8x128xf32>
      %40 = vector.shape_cast %39 : vector<1x8x128xf32> to vector<8x128xf32>
      %41 = vector.shape_cast %38 : vector<8x128xf32> to vector<1x8x128xf32>
      tpu.vector_store %arg6[%c0_26, %c0_27, %c0_28], %41 {strides = array<i32>} : memref<1x8x128xf32, #tpu.memory_space<vmem>>, vector<1x8x128xf32>,
    } else {
    }
    return
  }
  func.func @transform_0(%arg0: i32, %arg1: i32, %arg2: i32) -> (i32, i32) {
    %c1_i32 = arith.constant 1 : i32
    %0 = arith.muli %arg0, %c1_i32 : i32
    %1 = arith.addi %0, %arg2 : i32
    %c0_i32 = arith.constant 0 : i32
    %2 = arith.minsi %1, %c0_i32 : i32
    %c0_i32_0 = arith.constant 0 : i32
    return %arg1, %2 : i32, i32
  }
  func.func @transform_1(%arg0: i32, %arg1: i32, %arg2: i32) -> (i32, i32) {
    %c1_i32 = arith.constant 1 : i32
    %0 = arith.muli %arg0, %c1_i32 : i32
    %1 = arith.addi %0, %arg2 : i32
    %c0_i32 = arith.constant 0 : i32
    %2 = arith.minsi %1, %c0_i32 : i32
    %c0_i32_0 = arith.constant 0 : i32
    return %arg1, %2 : i32, i32
  }
  func.func @transform_2(%arg0: i32, %arg1: i32, %arg2: i32) -> (i32, i32, i32) {
    %c0_i32 = arith.constant 0 : i32
    %c0_i32_0 = arith.constant 0 : i32
    return %arg0, %arg1, %c0_i32 : i32, i32, i32
  }
  func.func @transform_3(%arg0: i32, %arg1: i32, %arg2: i32) -> (i32, i32, i32) {
    %c0_i32 = arith.constant 0 : i32
    %c0_i32_0 = arith.constant 0 : i32
    return %arg0, %arg1, %c0_i32 : i32, i32, i32
  }
}

</mosaic_0001>

<llo_original>
// kernel: iou_loss.1
$region0: #{iou_loss.1}
  #allocation0 [shape = 'u32[]', space=smem, size = 0x4, offset = 0x4, fixed_abs, tag = 'smem constant byte address 0x4 - core index']
  #allocation1 [shape = 'u32[144,128]{1,0:T(1,128)}', space=vmem, size = 0x12000, scoped, tag = 'internal scratch']
  #allocation2 [shape = 'f32[8,1]{1,0:T(8,128)}', space=vmem, size = 0x1000, scoped, tag = 'scratch operand']
  #allocation3 [shape = 'f32[8,1]{1,0:T(8,128)}', space=vmem, size = 0x1000, scoped, tag = 'scratch operand']
  %s0 = inlined_call_operand.vmem [shape: f32[8,256], index: 0, kind: input, shape index: {}]
  %s1 = inlined_call_operand.vmem [shape: s8[8,256], index: 1, kind: input, shape index: {}]
  %s2 = inlined_call_operand.vmem [shape: f32[1,8,128], index: 2, kind: output, shape index: {0}]
  %s3 = inlined_call_operand.vmem [shape: f32[1,8,128], index: 3, kind: output, shape index: {1}]
  %4 = xla_tuple %s2, %s3
  %s5 = sld [smem:[#allocation0]]
  $region34: #{iou_loss.1} parent=0
    _
  %s7 = ssub.s32 1, %s5
  %s8 = scalar_select 0, %s7, %s5
  // Predicated region
  $region2: #{iou_loss.1} parent=0 // pred_check
    _
  $region3: #{iou_loss.1} parent=0 // pred_check_branch
    %10 = sbr.rel (0) target = $region5
  $region4: #{iou_loss.1} parent=0 // pred_region
    %s11 = sadd.s32 0, 0
    %p12 = scmp.lt.s32.totalorder %s11, 0
    %s13 = scalar_select %p12, %s11, 0
    %s14 = smul.u32 2, %s13
    %p15 = scmp.lt.s32.totalorder %s14, 1
    %s16 = scalar_select %p15, %s14, 1
    %s17 = smul.addr %s16, 8
    %s18 = scalar_lea.vmem %s0, %s17
    %s19 = sadd.s32 0, 0
    %p20 = scmp.lt.s32.totalorder %s19, 0
    %s21 = scalar_select %p20, %s19, 0
    %s22 = smul.u32 2, %s21
  $region5: #{iou_loss.1} parent=0 // pred_fallthru
    _
  // Predicated region
  $region6: #{iou_loss.1} parent=0 // pred_check
    _
  $region7: #{iou_loss.1} parent=0 // pred_check_branch
    %24 = sbr.rel (0) target = $region9
  $region8: #{iou_loss.1} parent=0 // pred_region
    %s25 = sadd.s32 0, 0
    %p26 = scmp.lt.s32.totalorder %s25, 0
    %s27 = scalar_select %p26, %s25, 0
    %s28 = smul.u32 2, %s27
    %p29 = scmp.lt.s32.totalorder %s28, 1
    %s30 = scalar_select %p29, %s28, 1
    %s31 = smul.addr %s30, 2
    %s32 = scalar_lea.vmem %s1, %s31
    %s33 = sadd.s32 0, 0
    %p34 = scmp.lt.s32.totalorder %s33, 0
    %s35 = scalar_select %p34, %s33, 0
    %s36 = smul.u32 2, %s35
  $region9: #{iou_loss.1} parent=0 // pred_fallthru
    _
  %s37 = sadd.s32 0, 0
  %p38 = scmp.lt.s32.totalorder %s37, 0
  %s39 = scalar_select %p38, %s37, 0
  %s40 = smul.u32 2, %s39
  %p41 = scmp.lt.s32.totalorder %s40, 1
  %s42 = scalar_select %p41, %s40, 1
  %s43 = smul.addr %s42, 8
  %s44 = scalar_lea.vmem %s0, %s43
  %s45 = sadd.s32 0, 0
  %p46 = scmp.lt.s32.totalorder %s45, 0
  %s47 = scalar_select %p46, %s45, 0
  %s48 = smul.u32 2, %s47
  %p49 = scmp.lt.s32.totalorder %s48, 1
  %s50 = scalar_select %p49, %s48, 1
  %s51 = smul.addr %s50, 2
  %s52 = scalar_lea.vmem %s1, %s51
  %s53 = sadd.s32 0, 0
  %p54 = scmp.lt.s32.totalorder %s53, 0
  %s55 = scalar_select %p54, %s53, 0
  %s56 = smul.u32 2, %s55
  %p57 = scmp.lt.s32.totalorder %s56, 1
  %s58 = scalar_select %p57, %s56, 1
  %s59 = smul.addr %s58, 8
  %s60 = scalar_lea.vmem %s0, %s59
  %s61 = sadd.s32 0, 0
  %p62 = scmp.lt.s32.totalorder %s61, 0
  %s63 = scalar_select %p62, %s61, 0
  %s64 = smul.u32 2, %s63
  %s65 = sadd.s32 0, 0
  %p66 = scmp.lt.s32.totalorder %s65, 0
  %s67 = scalar_select %p66, %s65, 0
  %s68 = smul.u32 2, %s67
  %p69 = scmp.lt.s32.totalorder %s68, 1
  %s70 = scalar_select %p69, %s68, 1
  %s71 = smul.addr %s70, 2
  %s72 = scalar_lea.vmem %s1, %s71
  %s73 = sadd.s32 0, 0
  %p74 = scmp.lt.s32.totalorder %s73, 0
  %s75 = scalar_select %p74, %s73, 0
  %s76 = smul.u32 2, %s75
  %p77 = scmp.eq.s32.totalorder 0, 0
  // Predicated region
  $region10: #{iou_loss.1} parent=0 // pred_check
    %p78 = pneg %p77
  $region11: #{iou_loss.1} parent=0 // pred_check_branch
    %80 = sbr.rel (%p78) target = $region13
  $region12: #{iou_loss.1} parent=0 // pred_region
    %vm81 = vcmask 7168
    %82 = vst.msk [vmem:[#allocation2] sm:$0xff] %vm81, 0.0
    %83 = vst.msk [vmem:[#allocation3] sm:$0xff] %vm81, 0.0
  $region13: #{iou_loss.1} parent=0 // pred_fallthru
    _
  %v84 = vld [vmem:[%s60] sm:$0xff]
  %v85 = vld [vmem:[%s60 + $0x8] sm:$0xff]
  %v86 = vmul.f32 %v84, 0.5
  %v87 = vmul.f32 %v85, 0.5
  %v88 = vtanh.pop %v86
  %v89 = vtanh.pop %v87
  %v90 = vmul.f32 %v88, 0.5
  %v91 = vmul.f32 %v89, 0.5
  %v92 = vadd.f32 %v90, 0.5
  %v93 = vadd.f32 %v91, 0.5
  %v94 = vld [vmem:[%s72] sm:$0xf]
  %v95 = vunpack.c.0.s8 %v94
  %v96 = vunpack.c.1.s8 %v94
  %v97 = vcvt.s32.f32 %v95
  %v98 = vcvt.s32.f32 %v96
  %v99 = vld [vmem:[#allocation2] sm:$0xff]
  %v100 = vmul.f32 %v92, %v97
  %v101 = vmul.f32 %v93, %v98
  %v102 = vadd.f32 %v100, %v101
  %103 = vadd.xlane.f32.xlu0 %v102
  %v104 = vpop.xlane.xlu0 %103
  %v105 = vadd.f32 %v99, %v104
  %vm106 = vcmask 7168
  %107 = vst.msk [vmem:[#allocation2] sm:$0xff] %vm106, %v105
  %v108 = vld [vmem:[#allocation3] sm:$0xff]
  %v109 = vadd.f32 %v92, %v93
  %110 = vadd.xlane.f32.xlu0 %v109
  %v111 = vpop.xlane.xlu0 %110
  %v112 = vadd.f32 %v97, %v98
  %113 = vadd.xlane.f32.xlu0 %v112
  %v114 = vpop.xlane.xlu0 %113
  %v115 = vadd.f32 %v111, %v114
  %v116 = vadd.f32 %v108, %v115
  %117 = vst.msk [vmem:[#allocation3] sm:$0xff] %vm106, %v116
  // Predicated region
  $region14: #{iou_loss.1} parent=0 // pred_check
    %p118 = pneg %p77
  $region15: #{iou_loss.1} parent=0 // pred_check_branch
    %120 = sbr.rel (%p118) target = $region17
  $region16: #{iou_loss.1} parent=0 // pred_region
    %v121 = vld [vmem:[#allocation2] sm:$0xff]
    %123 = vset.pattern.permute.xlu0 0
    %124 = vperm.xlu0 %123, %v121
    %v125 = vpop.permute.xlu0 %124
    %127 = vst [vmem:[%s2] sm:$0xff] %v125
    %v128 = vld [vmem:[#allocation3] sm:$0xff]
    %130 = vset.pattern.permute.xlu0 0
    %131 = vperm.xlu0 %130, %v128
    %v132 = vpop.permute.xlu0 %131
    %134 = vst [vmem:[%s3] sm:$0xff] %v132
  $region17: #{iou_loss.1} parent=0 // pred_fallthru
    _
  // Predicated region
  $region18: #{iou_loss.1} parent=0 // pred_check
    _
  $region19: #{iou_loss.1} parent=0 // pred_check_branch
    %136 = sbr.rel (0) target = $region21
  $region20: #{iou_loss.1} parent=0 // pred_region
    _
  $region21: #{iou_loss.1} parent=0 // pred_fallthru
    _
  // Predicated region
  $region22: #{iou_loss.1} parent=0 // pred_check
    _
  $region23: #{iou_loss.1} parent=0 // pred_check_branch
    %138 = sbr.rel (0) target = $region25
  $region24: #{iou_loss.1} parent=0 // pred_region
    _
  $region25: #{iou_loss.1} parent=0 // pred_fallthru
    _
  // Predicated region
  $region26: #{iou_loss.1} parent=0 // pred_check
    _
  $region27: #{iou_loss.1} parent=0 // pred_check_branch
    %140 = sbr.rel (0) target = $region29
  $region28: #{iou_loss.1} parent=0 // pred_region
    _
  $region29: #{iou_loss.1} parent=0 // pred_fallthru
    _
  // Predicated region
  $region30: #{iou_loss.1} parent=0 // pred_check
    _
  $region31: #{iou_loss.1} parent=0 // pred_check_branch
    %142 = sbr.rel (0) target = $region33
  $region32: #{iou_loss.1} parent=0 // pred_region
    _
  $region33: #{iou_loss.1} parent=0 // pred_fallthru
    _

</llo_original>
